<compile_context>
chip_gen: v7x
topology: tpu7x:2x2x1
jax: 0.10.0
libtpu: 0.0.40
codegen_flags: <defaults>
</compile_context>

<pallas_src>
import jax
import jax.numpy as jnp
from jax.experimental import pallas as pl
from jax.experimental.pallas import tpu as pltpu

K_IN = 527          # logical input features
K_PAD = 640         # lane-aligned contraction dim (multiple of 128)
H1, H2, OUT = 256, 128, 2


def _round_up(x, m):
    return ((x + m - 1) // m) * m


def _mlp_kernel(x_ref, w1_ref, b1_ref, w2_ref, b2_ref, w3_ref, b3_ref, o_ref):
    # fc1 + relu  (bf16 operands, f32 accumulation)
    h = jnp.dot(x_ref[...], w1_ref[...], preferred_element_type=jnp.float32)
    h = jnp.maximum(h + b1_ref[...], 0.0)
    # fc2 + relu
    h = jnp.dot(h.astype(jnp.bfloat16), w2_ref[...],
                preferred_element_type=jnp.float32)
    h = jnp.maximum(h + b2_ref[...], 0.0)
    # fc3 + relu
    h = jnp.dot(h.astype(jnp.bfloat16), w3_ref[...],
                preferred_element_type=jnp.float32)
    o_ref[...] = jnp.maximum(h + b3_ref[...], 0.0).astype(o_ref.dtype)


def view_eval_forward(x, params, tm=512):
    """x: (B, 527) float32. params: dict of w1,b1,w2,b2,w3,b3 (f32, (in,out) layout)."""
    w1, b1 = params["w1"], params["b1"]
    w2, b2 = params["w2"], params["b2"]
    w3, b3 = params["w3"], params["b3"]
    B = x.shape[0]

    # Tile the batch: multiple-of-256 tiles for real batches, 8-aligned for tiny ones.
    if B <= tm:
        TM = _round_up(B, 8)
        B_pad = TM
    else:
        TM = _round_up(tm, 256)
        B_pad = _round_up(B, TM)
    n_tiles = B_pad // TM

    # Pad batch + contraction dim with zeros; cast matmul operands to bf16.
    x_p = jnp.pad(x, ((0, B_pad - B), (0, K_PAD - K_IN))).astype(jnp.bfloat16)
    w1_p = jnp.pad(w1, ((0, K_PAD - K_IN), (0, 0))).astype(jnp.bfloat16)
    w2_b = w2.astype(jnp.bfloat16)
    w3_b = w3.astype(jnp.bfloat16)
    b1_f = b1.astype(jnp.float32)
    b2_f = b2.astype(jnp.float32)
    b3_f = b3.astype(jnp.float32)

    resident = lambda a: pl.BlockSpec(a.shape, lambda i: (0,) * a.ndim)

    out = pl.pallas_call(
        _mlp_kernel,
        out_shape=jax.ShapeDtypeStruct((B_pad, OUT), jnp.float32),
        grid_spec=pltpu.PrefetchScalarGridSpec(
            num_scalar_prefetch=0,
            grid=(n_tiles,),
            in_specs=[
                pl.BlockSpec((TM, K_PAD), lambda i: (i, 0)),   # x tile (pipelined)
                resident(w1_p), resident(b1_f),
                resident(w2_b), resident(b2_f),
                resident(w3_b), resident(b3_f),
            ],
            out_specs=pl.BlockSpec((TM, OUT), lambda i: (i, 0)),
        ),
        compiler_params=pltpu.CompilerParams(
            dimension_semantics=("parallel",),
        ),
    )(x_p, w1_p, b1_f, w2_b, b2_f, w3_b, b3_f)

    return out[:B]


def init_params(key):
    """Deterministic init mimicking nn.Linear default (uniform +/- 1/sqrt(fan_in)).
    Weights stored as (in_features, out_features) = transpose of PyTorch layout."""
    dims = [(K_IN, H1), (H1, H2), (H2, OUT)]
    params = {}
    keys = jax.random.split(key, 2 * len(dims))
    for i, (fin, fout) in enumerate(dims):
        bound = 1.0 / jnp.sqrt(jnp.float32(fin))
        w = jax.random.uniform(keys[2 * i], (fin, fout), jnp.float32, -bound, bound)
        b = jax.random.uniform(keys[2 * i + 1], (1, fout), jnp.float32, -bound, bound)
        params[f"w{i + 1}"] = w
        params[f"b{i + 1}"] = b
    return params


if __name__ == "__main__":
    key = jax.random.PRNGKey(0)
    pkey, xkey = jax.random.split(key)
    params = init_params(pkey)

    B = 8
    x = jax.random.normal(xkey, (B, K_IN), dtype=jnp.float32)

    out = view_eval_forward(x, params)
    out = jax.block_until_ready(out)

    # sanity check vs. plain-JAX f32 reference (bf16 matmul operands -> looser tolerance)
    ref = x
    ref = jnp.maximum(ref @ params["w1"] + params["b1"], 0.0)
    ref = jnp.maximum(ref @ params["w2"] + params["b2"], 0.0)
    ref = jnp.maximum(ref @ params["w3"] + params["b3"], 0.0)
    assert out.shape == (B, OUT)
    assert jnp.allclose(out, ref, atol=5e-2, rtol=5e-2)

    print("KERNEL_OK")
</pallas_src>

<mosaic_0001>
module attributes {stable_mosaic.version = 11 : i64} {
  func.func @_mlp_kernel(%arg0: i32, %arg1: memref<8x640xbf16, #tpu.memory_space<vmem>>, %arg2: memref<640x256xbf16, #tpu.memory_space<vmem>>, %arg3: memref<1x256xf32, #tpu.memory_space<vmem>>, %arg4: memref<256x128xbf16, #tpu.memory_space<vmem>>, %arg5: memref<1x128xf32, #tpu.memory_space<vmem>>, %arg6: memref<128x2xbf16, #tpu.memory_space<vmem>>, %arg7: memref<1x2xf32, #tpu.memory_space<vmem>>, %arg8: memref<8x2xf32, #tpu.memory_space<vmem>>) attributes {dimension_semantics = [#tpu.dimension_semantics<parallel>], iteration_bounds = array<i64: 1>, scalar_prefetch = 0 : i64, scratch_operands = 0 : i64, tpu.core_type = #tpu.core_type<tc>, window_params = [{transform_indices = @transform_0, window_bounds = array<i64: 8, 640>}, {pipeline_mode = #tpu.pipeline_mode<synchronous>, transform_indices = @transform_1, window_bounds = array<i64: 640, 256>}, {pipeline_mode = #tpu.pipeline_mode<synchronous>, transform_indices = @transform_2, window_bounds = array<i64: 1, 256>}, {pipeline_mode = #tpu.pipeline_mode<synchronous>, transform_indices = @transform_3, window_bounds = array<i64: 256, 128>}, {pipeline_mode = #tpu.pipeline_mode<synchronous>, transform_indices = @transform_4, window_bounds = array<i64: 1, 128>}, {pipeline_mode = #tpu.pipeline_mode<synchronous>, transform_indices = @transform_5, window_bounds = array<i64: 128, 2>}, {pipeline_mode = #tpu.pipeline_mode<synchronous>, transform_indices = @transform_6, window_bounds = array<i64: 1, 2>}, {transform_indices = @transform_7, window_bounds = array<i64: 8, 2>}]} {
    %c0 = arith.constant 0 : index
    %c0_0 = arith.constant 0 : index
    %0 = vector.load %arg1[%c0, %c0_0] : memref<8x640xbf16, #tpu.memory_space<vmem>>, vector<8x640xbf16>
    %c0_1 = arith.constant 0 : index
    %c0_2 = arith.constant 0 : index
    %1 = vector.load %arg2[%c0_1, %c0_2] : memref<640x256xbf16, #tpu.memory_space<vmem>>, vector<640x256xbf16>
    %cst = arith.constant dense<0.000000e+00> : vector<8x256xf32>
    %2 = tpu.matmul %0, %1, %cst {dimension_numbers = #tpu.dot_dimension_numbers<[1], [0], [0], [1], [0, 0, 1, 1], [], []>} : vector<8x640xbf16>, vector<640x256xbf16>, vector<8x256xf32> -> vector<8x256xf32>
    %c0_3 = arith.constant 0 : index
    %c0_4 = arith.constant 0 : index
    %3 = vector.load %arg3[%c0_3, %c0_4] : memref<1x256xf32, #tpu.memory_space<vmem>>, vector<1x256xf32>
    %4 = vector.broadcast %3 : vector<1x256xf32> to vector<8x256xf32>
    %5 = arith.addf %2, %4 : vector<8x256xf32>
    %cst_5 = arith.constant 0.000000e+00 : f32
    %6 = vector.broadcast %cst_5 : f32 to vector<8x256xf32>
    %7 = arith.maximumf %5, %6 : vector<8x256xf32>
    %8 = arith.truncf %7 : vector<8x256xf32> to vector<8x256xbf16>
    %c0_6 = arith.constant 0 : index
    %c0_7 = arith.constant 0 : index
    %9 = vector.load %arg4[%c0_6, %c0_7] : memref<256x128xbf16, #tpu.memory_space<vmem>>, vector<256x128xbf16>
    %cst_8 = arith.constant dense<0.000000e+00> : vector<8x128xf32>
    %10 = tpu.matmul %8, %9, %cst_8 {dimension_numbers = #tpu.dot_dimension_numbers<[1], [0], [0], [1], [0, 0, 1, 1], [], []>} : vector<8x256xbf16>, vector<256x128xbf16>, vector<8x128xf32> -> vector<8x128xf32>
    %c0_9 = arith.constant 0 : index
    %c0_10 = arith.constant 0 : index
    %11 = vector.load %arg5[%c0_9, %c0_10] : memref<1x128xf32, #tpu.memory_space<vmem>>, vector<1x128xf32>
    %12 = vector.broadcast %11 : vector<1x128xf32> to vector<8x128xf32>
    %13 = arith.addf %10, %12 : vector<8x128xf32>
    %cst_11 = arith.constant 0.000000e+00 : f32
    %14 = vector.broadcast %cst_11 : f32 to vector<8x128xf32>
    %15 = arith.maximumf %13, %14 : vector<8x128xf32>
    %16 = arith.truncf %15 : vector<8x128xf32> to vector<8x128xbf16>
    %c0_12 = arith.constant 0 : index
    %c0_13 = arith.constant 0 : index
    %17 = vector.load %arg6[%c0_12, %c0_13] : memref<128x2xbf16, #tpu.memory_space<vmem>>, vector<128x2xbf16>
    %cst_14 = arith.constant dense<0.000000e+00> : vector<8x2xf32>
    %18 = tpu.matmul %16, %17, %cst_14 {dimension_numbers = #tpu.dot_dimension_numbers<[1], [0], [0], [1], [0, 0, 1, 1], [], []>} : vector<8x128xbf16>, vector<128x2xbf16>, vector<8x2xf32> -> vector<8x2xf32>
    %c0_15 = arith.constant 0 : index
    %c0_16 = arith.constant 0 : index
    %19 = vector.load %arg7[%c0_15, %c0_16] : memref<1x2xf32, #tpu.memory_space<vmem>>, vector<1x2xf32>
    %20 = vector.broadcast %19 : vector<1x2xf32> to vector<8x2xf32>
    %21 = arith.addf %18, %20 : vector<8x2xf32>
    %cst_17 = arith.constant 0.000000e+00 : f32
    %22 = vector.broadcast %cst_17 : f32 to vector<8x2xf32>
    %23 = arith.maximumf %21, %22 : vector<8x2xf32>
    %c0_18 = arith.constant 0 : index
    %c0_19 = arith.constant 0 : index
    %24 = vector.load %arg8[%c0_18, %c0_19] : memref<8x2xf32, #tpu.memory_space<vmem>>, vector<8x2xf32>
    tpu.vector_store %arg8[%c0_18, %c0_19], %23 {strides = array<i32>} : memref<8x2xf32, #tpu.memory_space<vmem>>, vector<8x2xf32>,
    return
  }
  func.func @transform_0(%arg0: i32) -> (i32, i32) {
    %c0_i32 = arith.constant 0 : i32
    %c0_i32_0 = arith.constant 0 : i32
    return %arg0, %c0_i32 : i32, i32
  }
  func.func @transform_1(%arg0: i32) -> (i32, i32) {
    %c0_i32 = arith.constant 0 : i32
    %c0_i32_0 = arith.constant 0 : i32
    %c0_i32_1 = arith.constant 0 : i32
    return %c0_i32, %c0_i32_0 : i32, i32
  }
  func.func @transform_2(%arg0: i32) -> (i32, i32) {
    %c0_i32 = arith.constant 0 : i32
    %c0_i32_0 = arith.constant 0 : i32
    %c0_i32_1 = arith.constant 0 : i32
    return %c0_i32, %c0_i32_0 : i32, i32
  }
  func.func @transform_3(%arg0: i32) -> (i32, i32) {
    %c0_i32 = arith.constant 0 : i32
    %c0_i32_0 = arith.constant 0 : i32
    %c0_i32_1 = arith.constant 0 : i32
    return %c0_i32, %c0_i32_0 : i32, i32
  }
  func.func @transform_4(%arg0: i32) -> (i32, i32) {
    %c0_i32 = arith.constant 0 : i32
    %c0_i32_0 = arith.constant 0 : i32
    %c0_i32_1 = arith.constant 0 : i32
    return %c0_i32, %c0_i32_0 : i32, i32
  }
  func.func @transform_5(%arg0: i32) -> (i32, i32) {
    %c0_i32 = arith.constant 0 : i32
    %c0_i32_0 = arith.constant 0 : i32
    %c0_i32_1 = arith.constant 0 : i32
    return %c0_i32, %c0_i32_0 : i32, i32
  }
  func.func @transform_6(%arg0: i32) -> (i32, i32) {
    %c0_i32 = arith.constant 0 : i32
    %c0_i32_0 = arith.constant 0 : i32
    %c0_i32_1 = arith.constant 0 : i32
    return %c0_i32, %c0_i32_0 : i32, i32
  }
  func.func @transform_7(%arg0: i32) -> (i32, i32) {
    %c0_i32 = arith.constant 0 : i32
    %c0_i32_0 = arith.constant 0 : i32
    return %arg0, %c0_i32 : i32, i32
  }
}

</mosaic_0001>

<llo_original>
// kernel: tpu_custom_call.1
$region0: #{tpu_custom_call.1}
  #allocation0 [shape = 'u32[]', space=smem, size = 0x4, offset = 0x4, fixed_abs, tag = 'smem constant byte address 0x4 - core index']
  #allocation1 [shape = 'u32[144,128]{1,0:T(1,128)}', space=vmem, size = 0x12000, scoped, tag = 'internal scratch']
  %s0 = inlined_call_operand.vmem [shape: bf16[8,640], index: 0, kind: input, shape index: {}]
  %s1 = inlined_call_operand.hbm [shape: bf16[640,256], index: 1, kind: input, shape index: {}]
  %s2 = inlined_call_operand.vmem [shape: f32[1,256], index: 2, kind: input, shape index: {}]
  %s3 = inlined_call_operand.hbm [shape: bf16[256,128], index: 3, kind: input, shape index: {}]
  %s4 = inlined_call_operand.vmem [shape: f32[1,128], index: 4, kind: input, shape index: {}]
  %s5 = inlined_call_operand.vmem [shape: bf16[128,2], index: 5, kind: input, shape index: {}]
  %s6 = inlined_call_operand.vmem [shape: f32[1,2], index: 6, kind: input, shape index: {}]
  %s7 = inlined_call_operand.vmem [shape: f32[8,2], index: 7, kind: output, shape index: {}]
  %s8 = sld [smem:[#allocation0]]
  $region46: #{tpu_custom_call.1} parent=0
    _
  %s10 = ssub.s32 1, %s8
  %s11 = scalar_select 0, %s10, %s8
  $region1: #{tpu_custom_call.1} parent=0
    #allocation2 [shape = 'u8[327680]{0}', space=vmem, size = 0x50000, scoped, tag = 'input window, operand 1, single buffered']
    #allocation3 [shape = 's32[1]{0}', space=sflag, size = 0x4, scoped, tag = 'scoped memory for tpu_custom_call.1']
    #allocation4 [shape = 'u8[65536]{0}', space=vmem, size = 0x10000, scoped, tag = 'input window, operand 3, single buffered']
    #allocation5 [shape = 's32[1]{0}', space=sflag, size = 0x4, scoped, tag = 'scoped memory for tpu_custom_call.1']
    %12 = vsyncpa [#allocation3], 0
    %13 = vsyncpa [#allocation5], 0
    // Predicated region
    $region2: #{tpu_custom_call.1} parent=1 // pred_check
      _
    $region3: #{tpu_custom_call.1} parent=1 // pred_check_branch
      %15 = sbr.rel (0) target = $region5
    $region4: #{tpu_custom_call.1} parent=1 // pred_region
      _
    $region5: #{tpu_custom_call.1} parent=1 // pred_fallthru
      _
    // Predicated region
    $region6: #{tpu_custom_call.1} parent=1 // pred_check
      _
    $region7: #{tpu_custom_call.1} parent=1 // pred_check_branch
      %17 = sbr.rel (0) target = $region9
    $region8: #{tpu_custom_call.1} parent=1 // pred_region
      %s19 = ssub.s32 10240, 10240
      %20 = vsyncadd [#allocation3], %s19
      %s21 = sshll.u32 [#allocation2], 4
      %s22 = int_to_ptr.vmem [resolvable:$true] %s21
      %27 = dma.hbm_to_vmem [thread:$0]  %s1, 10240, %s22, [#allocation3], 128, 128, 8
    $region9: #{tpu_custom_call.1} parent=1 // pred_fallthru
      _
    // Predicated region
    $region10: #{tpu_custom_call.1} parent=1 // pred_check
      _
    $region11: #{tpu_custom_call.1} parent=1 // pred_check_branch
      %29 = sbr.rel (0) target = $region13
    $region12: #{tpu_custom_call.1} parent=1 // pred_region
      _
    $region13: #{tpu_custom_call.1} parent=1 // pred_fallthru
      _
    // Predicated region
    $region14: #{tpu_custom_call.1} parent=1 // pred_check
      _
    $region15: #{tpu_custom_call.1} parent=1 // pred_check_branch
      %31 = sbr.rel (0) target = $region17
    $region16: #{tpu_custom_call.1} parent=1 // pred_region
      %s33 = ssub.s32 2048, 2048
      %34 = vsyncadd [#allocation5], %s33
      %s35 = sshll.u32 [#allocation4], 4
      %s36 = int_to_ptr.vmem [resolvable:$true] %s35
      %41 = dma.hbm_to_vmem [thread:$0]  %s3, 2048, %s36, [#allocation5], 64, 64, 4
    $region17: #{tpu_custom_call.1} parent=1 // pred_fallthru
      _
    // Predicated region
    $region18: #{tpu_custom_call.1} parent=1 // pred_check
      _
    $region19: #{tpu_custom_call.1} parent=1 // pred_check_branch
      %43 = sbr.rel (0) target = $region21
    $region20: #{tpu_custom_call.1} parent=1 // pred_region
      _
    $region21: #{tpu_custom_call.1} parent=1 // pred_fallthru
      _
    // Predicated region
    $region22: #{tpu_custom_call.1} parent=1 // pred_check
      _
    $region23: #{tpu_custom_call.1} parent=1 // pred_check_branch
      %45 = sbr.rel (0) target = $region25
    $region24: #{tpu_custom_call.1} parent=1 // pred_region
      _
    $region25: #{tpu_custom_call.1} parent=1 // pred_fallthru
      _
    // Predicated region
    $region26: #{tpu_custom_call.1} parent=1 // pred_check
      _
    $region27: #{tpu_custom_call.1} parent=1 // pred_check_branch
      %47 = sbr.rel (0) target = $region29
    $region28: #{tpu_custom_call.1} parent=1 // pred_region
      _
    $region29: #{tpu_custom_call.1} parent=1 // pred_fallthru
      _
    // Predicated region
    $region30: #{tpu_custom_call.1} parent=1 // pred_check
      _
    $region31: #{tpu_custom_call.1} parent=1 // pred_check_branch
      %49 = sbr.rel (0) target = $region33
    $region32: #{tpu_custom_call.1} parent=1 // pred_region
      %50 = dma.done [#allocation3], 10240
    $region33: #{tpu_custom_call.1} parent=1 // pred_fallthru
      _
    // Predicated region
    $region34: #{tpu_custom_call.1} parent=1 // pred_check
      _
    $region35: #{tpu_custom_call.1} parent=1 // pred_check_branch
      %52 = sbr.rel (0) target = $region37
    $region36: #{tpu_custom_call.1} parent=1 // pred_region
      %53 = dma.done [#allocation5], 2048
    $region37: #{tpu_custom_call.1} parent=1 // pred_fallthru
      _
    %v55 = vld [vmem:[%s0] sm:$0xff]
    %v56 = vld [vmem:[%s0 + $0x8] sm:$0xff]
    %v57 = vld [vmem:[%s0 + $0x10] sm:$0xf]
    %v58 = vld [vmem:[#allocation2] sm:$0xff]
    %v59 = vld [vmem:[#allocation2 + $0x8] sm:$0xff]
    %v60 = vld [vmem:[#allocation2 + $0x10] sm:$0xff]
    %v61 = vld [vmem:[#allocation2 + $0x18] sm:$0xff]
    %v62 = vld [vmem:[#allocation2 + $0x20] sm:$0xff]
    %v63 = vld [vmem:[#allocation2 + $0x28] sm:$0xff]
    %v64 = vld [vmem:[#allocation2 + $0x30] sm:$0xff]
    %v65 = vld [vmem:[#allocation2 + $0x38] sm:$0xff]
    %v66 = vld [vmem:[#allocation2 + $0x40] sm:$0xff]
    %v67 = vld [vmem:[#allocation2 + $0x48] sm:$0xff]
    %v68 = vld [vmem:[#allocation2 + $0x50] sm:$0xff]
    %v69 = vld [vmem:[#allocation2 + $0x58] sm:$0xff]
    %v70 = vld [vmem:[#allocation2 + $0x60] sm:$0xff]
    %v71 = vld [vmem:[#allocation2 + $0x68] sm:$0xff]
    %v72 = vld [vmem:[#allocation2 + $0x70] sm:$0xff]
    %v73 = vld [vmem:[#allocation2 + $0x78] sm:$0xff]
    %v74 = vld [vmem:[#allocation2 + $0x80] sm:$0xff]
    %v75 = vld [vmem:[#allocation2 + $0x88] sm:$0xff]
    %v76 = vld [vmem:[#allocation2 + $0x90] sm:$0xff]
    %v77 = vld [vmem:[#allocation2 + $0x98] sm:$0xff]
    %v78 = vld [vmem:[#allocation2 + $0xa0] sm:$0xff]
    %v79 = vld [vmem:[#allocation2 + $0xa8] sm:$0xff]
    %v80 = vld [vmem:[#allocation2 + $0xb0] sm:$0xff]
    %v81 = vld [vmem:[#allocation2 + $0xb8] sm:$0xff]
    %v82 = vld [vmem:[#allocation2 + $0xc0] sm:$0xff]
    %v83 = vld [vmem:[#allocation2 + $0xc8] sm:$0xff]
    %v84 = vld [vmem:[#allocation2 + $0xd0] sm:$0xff]
    %v85 = vld [vmem:[#allocation2 + $0xd8] sm:$0xff]
    %v86 = vld [vmem:[#allocation2 + $0xe0] sm:$0xff]
    %v87 = vld [vmem:[#allocation2 + $0xe8] sm:$0xff]
    %v88 = vld [vmem:[#allocation2 + $0xf0] sm:$0xff]
    %v89 = vld [vmem:[#allocation2 + $0xf8] sm:$0xff]
    %v90 = vld [vmem:[#allocation2 + $0x100] sm:$0xff]
    %v91 = vld [vmem:[#allocation2 + $0x108] sm:$0xff]
    %v92 = vld [vmem:[#allocation2 + $0x110] sm:$0xff]
    %v93 = vld [vmem:[#allocation2 + $0x118] sm:$0xff]
    %v94 = vld [vmem:[#allocation2 + $0x120] sm:$0xff]
    %v95 = vld [vmem:[#allocation2 + $0x128] sm:$0xff]
    %v96 = vld [vmem:[#allocation2 + $0x130] sm:$0xff]
    %v97 = vld [vmem:[#allocation2 + $0x138] sm:$0xff]
    %v98 = vld [vmem:[#allocation2 + $0x140] sm:$0xff]
    %v99 = vld [vmem:[#allocation2 + $0x148] sm:$0xff]
    %v100 = vld [vmem:[#allocation2 + $0x150] sm:$0xff]
    %v101 = vld [vmem:[#allocation2 + $0x158] sm:$0xff]
    %v102 = vld [vmem:[#allocation2 + $0x160] sm:$0xff]
    %v103 = vld [vmem:[#allocation2 + $0x168] sm:$0xff]
    %v104 = vld [vmem:[#allocation2 + $0x170] sm:$0xff]
    %v105 = vld [vmem:[#allocation2 + $0x178] sm:$0xff]
    %v106 = vld [vmem:[#allocation2 + $0x180] sm:$0xff]
    %v107 = vld [vmem:[#allocation2 + $0x188] sm:$0xff]
    %v108 = vld [vmem:[#allocation2 + $0x190] sm:$0xff]
    %v109 = vld [vmem:[#allocation2 + $0x198] sm:$0xff]
    %v110 = vld [vmem:[#allocation2 + $0x1a0] sm:$0xff]
    %v111 = vld [vmem:[#allocation2 + $0x1a8] sm:$0xff]
    %v112 = vld [vmem:[#allocation2 + $0x1b0] sm:$0xff]
    %v113 = vld [vmem:[#allocation2 + $0x1b8] sm:$0xff]
    %v114 = vld [vmem:[#allocation2 + $0x1c0] sm:$0xff]
    %v115 = vld [vmem:[#allocation2 + $0x1c8] sm:$0xff]
    %v116 = vld [vmem:[#allocation2 + $0x1d0] sm:$0xff]
    %v117 = vld [vmem:[#allocation2 + $0x1d8] sm:$0xff]
    %v118 = vld [vmem:[#allocation2 + $0x1e0] sm:$0xff]
    %v119 = vld [vmem:[#allocation2 + $0x1e8] sm:$0xff]
    %v120 = vld [vmem:[#allocation2 + $0x1f0] sm:$0xff]
    %v121 = vld [vmem:[#allocation2 + $0x1f8] sm:$0xff]
    %v122 = vld [vmem:[#allocation2 + $0x200] sm:$0xff]
    %v123 = vld [vmem:[#allocation2 + $0x208] sm:$0xff]
    %v124 = vld [vmem:[#allocation2 + $0x210] sm:$0xff]
    %v125 = vld [vmem:[#allocation2 + $0x218] sm:$0xff]
    %v126 = vld [vmem:[#allocation2 + $0x220] sm:$0xff]
    %v127 = vld [vmem:[#allocation2 + $0x228] sm:$0xff]
    %v128 = vld [vmem:[#allocation2 + $0x230] sm:$0xff]
    %v129 = vld [vmem:[#allocation2 + $0x238] sm:$0xff]
    %v130 = vld [vmem:[#allocation2 + $0x240] sm:$0xff]
    %v131 = vld [vmem:[#allocation2 + $0x248] sm:$0xff]
    %v132 = vld [vmem:[#allocation2 + $0x250] sm:$0xff]
    %v133 = vld [vmem:[#allocation2 + $0x258] sm:$0xff]
    %v134 = vld [vmem:[#allocation2 + $0x260] sm:$0xff]
    %v135 = vld [vmem:[#allocation2 + $0x268] sm:$0xff]
    %v136 = vld [vmem:[#allocation2 + $0x270] sm:$0xff]
    %v137 = vld [vmem:[#allocation2 + $0x278] sm:$0xff]
    %v138 = vld [vmem:[%s2] sm:$0x3]
    %v140 = vlaneseq
    %v141 = vshrl.u32 %v140, 7
    %v142 = vsub.s32 0, %v141
    %v143 = vrot.slane %v138, %v142
    %v144 = vlaneseq
    %v145 = vshrl.u32 %v144, 7
    %v146 = vsub.s32 1, %v145
    %v147 = vrot.slane %v138, %v146
    %v153 = vunpack.c.l.b16 %v55
    %v154 = vunpack.c.h.b16 %v55
    %v155 = vunpack.c.l.b16 %v56
    %v156 = vunpack.c.h.b16 %v56
    %v157 = vunpack.c.l.b16 %v57
    %v158 = vpack.c.b16 %v153, %v153
    %v159 = vpack.c.b16 %v154, %v154
    %v160 = vpack.c.b16 %v155, %v155
    %v161 = vpack.c.b16 %v156, %v156
    %v162 = vpack.c.b16 %v157, %v157
    %v248 = vunpack.c.l.b16 %v58
    %v249 = vunpack.c.h.b16 %v58
    %v250 = vunpack.c.l.b16 %v59
    %v251 = vunpack.c.h.b16 %v59
    %v252 = vunpack.c.l.b16 %v60
    %v253 = vunpack.c.h.b16 %v60
    %v254 = vunpack.c.l.b16 %v61
    %v255 = vunpack.c.h.b16 %v61
    %v256 = vunpack.c.l.b16 %v62
    %v257 = vunpack.c.h.b16 %v62
    %v258 = vunpack.c.l.b16 %v63
    %v259 = vunpack.c.h.b16 %v63
    %v260 = vunpack.c.l.b16 %v64
    %v261 = vunpack.c.h.b16 %v64
    %v262 = vunpack.c.l.b16 %v65
    %v263 = vunpack.c.h.b16 %v65
    %v264 = vunpack.c.l.b16 %v66
    %v265 = vunpack.c.h.b16 %v66
    %v266 = vunpack.c.l.b16 %v67
    %v267 = vunpack.c.h.b16 %v67
    %v268 = vunpack.c.l.b16 %v68
    %v269 = vunpack.c.h.b16 %v68
    %v270 = vunpack.c.l.b16 %v69
    %v271 = vunpack.c.h.b16 %v69
    %v272 = vunpack.c.l.b16 %v70
    %v273 = vunpack.c.h.b16 %v70
    %v274 = vunpack.c.l.b16 %v71
    %v275 = vunpack.c.h.b16 %v71
    %v276 = vunpack.c.l.b16 %v72
    %v277 = vunpack.c.h.b16 %v72
    %v278 = vunpack.c.l.b16 %v73
    %v279 = vunpack.c.h.b16 %v73
    %v280 = vunpack.c.l.b16 %v74
    %v281 = vunpack.c.h.b16 %v74
    %v282 = vunpack.c.l.b16 %v75
    %v283 = vunpack.c.h.b16 %v75
    %v284 = vunpack.c.l.b16 %v76
    %v285 = vunpack.c.h.b16 %v76
    %v286 = vunpack.c.l.b16 %v77
    %v287 = vunpack.c.h.b16 %v77
    %v288 = vunpack.c.l.b16 %v78
    %v289 = vunpack.c.h.b16 %v78
    %v290 = vunpack.c.l.b16 %v79
    %v291 = vunpack.c.h.b16 %v79
    %v292 = vunpack.c.l.b16 %v80
    %v293 = vunpack.c.h.b16 %v80
    %v294 = vunpack.c.l.b16 %v81
    %v295 = vunpack.c.h.b16 %v81
    %v296 = vunpack.c.l.b16 %v82
    %v297 = vunpack.c.h.b16 %v82
    %v298 = vunpack.c.l.b16 %v83
    %v299 = vunpack.c.h.b16 %v83
    %v300 = vunpack.c.l.b16 %v84
    %v301 = vunpack.c.h.b16 %v84
    %v302 = vunpack.c.l.b16 %v85
    %v303 = vunpack.c.h.b16 %v85
    %v304 = vunpack.c.l.b16 %v86
    %v305 = vunpack.c.h.b16 %v86
    %v306 = vunpack.c.l.b16 %v87
    %v307 = vunpack.c.h.b16 %v87
    %v308 = vunpack.c.l.b16 %v88
    %v309 = vunpack.c.h.b16 %v88
    %v310 = vunpack.c.l.b16 %v89
    %v311 = vunpack.c.h.b16 %v89
    %v312 = vunpack.c.l.b16 %v90
    %v313 = vunpack.c.h.b16 %v90
    %v314 = vunpack.c.l.b16 %v91
    %v315 = vunpack.c.h.b16 %v91
    %v316 = vunpack.c.l.b16 %v92
    %v317 = vunpack.c.h.b16 %v92
    %v318 = vunpack.c.l.b16 %v93
    %v319 = vunpack.c.h.b16 %v93
    %v320 = vunpack.c.l.b16 %v94
    %v321 = vunpack.c.h.b16 %v94
    %v322 = vunpack.c.l.b16 %v95
    %v323 = vunpack.c.h.b16 %v95
    %v324 = vunpack.c.l.b16 %v96
    %v325 = vunpack.c.h.b16 %v96
    %v326 = vunpack.c.l.b16 %v97
    %v327 = vunpack.c.h.b16 %v97
    %v328 = vunpack.c.l.b16 %v98
    %v329 = vunpack.c.h.b16 %v98
    %v330 = vunpack.c.l.b16 %v99
    %v331 = vunpack.c.h.b16 %v99
    %v332 = vunpack.c.l.b16 %v100
    %v333 = vunpack.c.h.b16 %v100
    %v334 = vunpack.c.l.b16 %v101
    %v335 = vunpack.c.h.b16 %v101
    %v336 = vunpack.c.l.b16 %v102
    %v337 = vunpack.c.h.b16 %v102
    %v338 = vunpack.c.l.b16 %v103
    %v339 = vunpack.c.h.b16 %v103
    %v340 = vunpack.c.l.b16 %v104
    %v341 = vunpack.c.h.b16 %v104
    %v342 = vunpack.c.l.b16 %v105
    %v343 = vunpack.c.h.b16 %v105
    %v344 = vunpack.c.l.b16 %v106
    %v345 = vunpack.c.h.b16 %v106
    %v346 = vunpack.c.l.b16 %v107
    %v347 = vunpack.c.h.b16 %v107
    %v348 = vunpack.c.l.b16 %v108
    %v349 = vunpack.c.h.b16 %v108
    %v350 = vunpack.c.l.b16 %v109
    %v351 = vunpack.c.h.b16 %v109
    %v352 = vunpack.c.l.b16 %v110
    %v353 = vunpack.c.h.b16 %v110
    %v354 = vunpack.c.l.b16 %v111
    %v355 = vunpack.c.h.b16 %v111
    %v356 = vunpack.c.l.b16 %v112
    %v357 = vunpack.c.h.b16 %v112
    %v358 = vunpack.c.l.b16 %v113
    %v359 = vunpack.c.h.b16 %v113
    %v360 = vunpack.c.l.b16 %v114
    %v361 = vunpack.c.h.b16 %v114
    %v362 = vunpack.c.l.b16 %v115
    %v363 = vunpack.c.h.b16 %v115
    %v364 = vunpack.c.l.b16 %v116
    %v365 = vunpack.c.h.b16 %v116
    %v366 = vunpack.c.l.b16 %v117
    %v367 = vunpack.c.h.b16 %v117
    %v368 = vunpack.c.l.b16 %v118
    %v369 = vunpack.c.h.b16 %v118
    %v370 = vunpack.c.l.b16 %v119
    %v371 = vunpack.c.h.b16 %v119
    %v372 = vunpack.c.l.b16 %v120
    %v373 = vunpack.c.h.b16 %v120
    %v374 = vunpack.c.l.b16 %v121
    %v375 = vunpack.c.h.b16 %v121
    %v376 = vunpack.c.l.b16 %v122
    %v377 = vunpack.c.h.b16 %v122
    %v378 = vunpack.c.l.b16 %v123
    %v379 = vunpack.c.h.b16 %v123
    %v380 = vunpack.c.l.b16 %v124
    %v381 = vunpack.c.h.b16 %v124
    %v382 = vunpack.c.l.b16 %v125
    %v383 = vunpack.c.h.b16 %v125
    %v384 = vunpack.c.l.b16 %v126
    %v385 = vunpack.c.h.b16 %v126
    %v386 = vunpack.c.l.b16 %v127
    %v387 = vunpack.c.h.b16 %v127
    %v388 = vunpack.c.l.b16 %v128
    %v389 = vunpack.c.h.b16 %v128
    %v390 = vunpack.c.l.b16 %v129
    %v391 = vunpack.c.h.b16 %v129
    %v392 = vunpack.c.l.b16 %v130
    %v393 = vunpack.c.h.b16 %v130
    %v394 = vunpack.c.l.b16 %v131
    %v395 = vunpack.c.h.b16 %v131
    %v396 = vunpack.c.l.b16 %v132
    %v397 = vunpack.c.h.b16 %v132
    %v398 = vunpack.c.l.b16 %v133
    %v399 = vunpack.c.h.b16 %v133
    %v400 = vunpack.c.l.b16 %v134
    %v401 = vunpack.c.h.b16 %v134
    %v402 = vunpack.c.l.b16 %v135
    %v403 = vunpack.c.h.b16 %v135
    %v404 = vunpack.c.l.b16 %v136
    %v405 = vunpack.c.h.b16 %v136
    %v406 = vunpack.c.l.b16 %v137
    %v407 = vunpack.c.h.b16 %v137
    %v408 = vpack.c.b16 %v250, %v248
    %v409 = vpack.c.b16 %v251, %v249
    %v410 = vpack.c.b16 %v254, %v252
    %v411 = vpack.c.b16 %v255, %v253
    %v412 = vpack.c.b16 %v258, %v256
    %v413 = vpack.c.b16 %v259, %v257
    %v414 = vpack.c.b16 %v262, %v260
    %v415 = vpack.c.b16 %v263, %v261
    %v416 = vpack.c.b16 %v266, %v264
    %v417 = vpack.c.b16 %v267, %v265
    %v418 = vpack.c.b16 %v270, %v268
    %v419 = vpack.c.b16 %v271, %v269
    %v420 = vpack.c.b16 %v274, %v272
    %v421 = vpack.c.b16 %v275, %v273
    %v422 = vpack.c.b16 %v278, %v276
    %v423 = vpack.c.b16 %v279, %v277
    %v424 = vpack.c.b16 %v282, %v280
    %v425 = vpack.c.b16 %v283, %v281
    %v426 = vpack.c.b16 %v286, %v284
    %v427 = vpack.c.b16 %v287, %v285
    %v428 = vpack.c.b16 %v290, %v288
    %v429 = vpack.c.b16 %v291, %v289
    %v430 = vpack.c.b16 %v294, %v292
    %v431 = vpack.c.b16 %v295, %v293
    %v432 = vpack.c.b16 %v298, %v296
    %v433 = vpack.c.b16 %v299, %v297
    %v434 = vpack.c.b16 %v302, %v300
    %v435 = vpack.c.b16 %v303, %v301
    %v436 = vpack.c.b16 %v306, %v304
    %v437 = vpack.c.b16 %v307, %v305
    %v438 = vpack.c.b16 %v310, %v308
    %v439 = vpack.c.b16 %v311, %v309
    %v440 = vpack.c.b16 %v314, %v312
    %v441 = vpack.c.b16 %v315, %v313
    %v442 = vpack.c.b16 %v318, %v316
    %v443 = vpack.c.b16 %v319, %v317
    %v444 = vpack.c.b16 %v322, %v320
    %v445 = vpack.c.b16 %v323, %v321
    %v446 = vpack.c.b16 %v326, %v324
    %v447 = vpack.c.b16 %v327, %v325
    %v448 = vpack.c.b16 %v330, %v328
    %v449 = vpack.c.b16 %v331, %v329
    %v450 = vpack.c.b16 %v334, %v332
    %v451 = vpack.c.b16 %v335, %v333
    %v452 = vpack.c.b16 %v338, %v336
    %v453 = vpack.c.b16 %v339, %v337
    %v454 = vpack.c.b16 %v342, %v340
    %v455 = vpack.c.b16 %v343, %v341
    %v456 = vpack.c.b16 %v346, %v344
    %v457 = vpack.c.b16 %v347, %v345
    %v458 = vpack.c.b16 %v350, %v348
    %v459 = vpack.c.b16 %v351, %v349
    %v460 = vpack.c.b16 %v354, %v352
    %v461 = vpack.c.b16 %v355, %v353
    %v462 = vpack.c.b16 %v358, %v356
    %v463 = vpack.c.b16 %v359, %v357
    %v464 = vpack.c.b16 %v362, %v360
    %v465 = vpack.c.b16 %v363, %v361
    %v466 = vpack.c.b16 %v366, %v364
    %v467 = vpack.c.b16 %v367, %v365
    %v468 = vpack.c.b16 %v370, %v368
    %v469 = vpack.c.b16 %v371, %v369
    %v470 = vpack.c.b16 %v374, %v372
    %v471 = vpack.c.b16 %v375, %v373
    %v472 = vpack.c.b16 %v378, %v376
    %v473 = vpack.c.b16 %v379, %v377
    %v474 = vpack.c.b16 %v382, %v380
    %v475 = vpack.c.b16 %v383, %v381
    %v476 = vpack.c.b16 %v386, %v384
    %v477 = vpack.c.b16 %v387, %v385
    %v478 = vpack.c.b16 %v390, %v388
    %v479 = vpack.c.b16 %v391, %v389
    %v480 = vpack.c.b16 %v394, %v392
    %v481 = vpack.c.b16 %v395, %v393
    %v482 = vpack.c.b16 %v398, %v396
    %v483 = vpack.c.b16 %v399, %v397
    %v484 = vpack.c.b16 %v402, %v400
    %v485 = vpack.c.b16 %v403, %v401
    %v486 = vpack.c.b16 %v406, %v404
    %v487 = vpack.c.b16 %v407, %v405
    %568 = vmatprep.subr.bf16.mxu0 %v409
    %569 = vmatpush1.bf16.msra.mxu0 %v408
    %570 = vmatprep.subr.bf16.mxu0 %v411
    %571 = vmatpush1.bf16.msra.mxu0 %v410
    %572 = vmatprep.subr.bf16.mxu0 %v413
    %573 = vmatpush1.bf16.msra.mxu0 %v412
    %574 = vmatprep.subr.bf16.mxu0 %v415
    %575 = vmatpush1.bf16.msra.mxu0 %v414
    %576 = vmatprep.subr.bf16.mxu0 %v417
    %577 = vmatpush1.bf16.msra.mxu0 %v416
    %578 = vmatprep.subr.bf16.mxu0 %v419
    %579 = vmatpush1.bf16.msra.mxu0 %v418
    %580 = vmatprep.subr.bf16.mxu0 %v421
    %581 = vmatpush1.bf16.msra.mxu0 %v420
    %582 = vmatprep.subr.bf16.mxu0 %v423
    %583 = vmatpush1.bf16.msra.mxu0 %v422
    %584 = vmatprep.subr.bf16.mxu0 %v425
    %585 = vmatpush1.bf16.msra.mxu0 %v424
    %586 = vmatprep.subr.bf16.mxu0 %v427
    %587 = vmatpush1.bf16.msra.mxu0 %v426
    %588 = vmatprep.subr.bf16.mxu0 %v429
    %589 = vmatpush1.bf16.msra.mxu0 %v428
    %590 = vmatprep.subr.bf16.mxu0 %v431
    %591 = vmatpush1.bf16.msra.mxu0 %v430
    %592 = vmatprep.subr.bf16.mxu0 %v433
    %593 = vmatpush1.bf16.msra.mxu0 %v432
    %594 = vmatprep.subr.bf16.mxu0 %v435
    %595 = vmatpush1.bf16.msra.mxu0 %v434
    %596 = vmatprep.subr.bf16.mxu0 %v437
    %597 = vmatpush1.bf16.msra.mxu0 %v436
    %598 = vmatprep.subr.bf16.mxu0 %v439
    %599 = vmatpush1.bf16.msra.mxu0 %v438
    %600 = vmatprep.mubr.bf16.mxu0 %v159
    %601 = vmatmul.mubr.bf16.gmra.mrb[0].mxu0 %v158
    %v602 = vpop.f32.mrb[0].mxu0
    %v603 = vadd.f32 %v143, %v602
    %v604 = vpop.f32.mrb[0].mxu0
    %v605 = vadd.f32 %v147, %v604
    %v606 = vpop.f32.mrb[0].mxu0
    %v607 = vpop.f32.mrb[0].mxu0
    %608 = vdwg.mxu0
    %609 = vmatprep.subr.bf16.mxu0 %v441
    %610 = vmatpush1.bf16.msra.mxu0 %v440
    %611 = vmatprep.subr.bf16.mxu0 %v443
    %612 = vmatpush1.bf16.msra.mxu0 %v442
    %613 = vmatprep.subr.bf16.mxu0 %v445
    %614 = vmatpush1.bf16.msra.mxu0 %v444
    %615 = vmatprep.subr.bf16.mxu0 %v447
    %616 = vmatpush1.bf16.msra.mxu0 %v446
    %617 = vmatprep.subr.bf16.mxu0 %v449
    %618 = vmatpush1.bf16.msra.mxu0 %v448
    %619 = vmatprep.subr.bf16.mxu0 %v451
    %620 = vmatpush1.bf16.msra.mxu0 %v450
    %621 = vmatprep.subr.bf16.mxu0 %v453
    %622 = vmatpush1.bf16.msra.mxu0 %v452
    %623 = vmatprep.subr.bf16.mxu0 %v455
    %624 = vmatpush1.bf16.msra.mxu0 %v454
    %625 = vmatprep.subr.bf16.mxu0 %v457
    %626 = vmatpush1.bf16.msra.mxu0 %v456
    %627 = vmatprep.subr.bf16.mxu0 %v459
    %628 = vmatpush1.bf16.msra.mxu0 %v458
    %629 = vmatprep.subr.bf16.mxu0 %v461
    %630 = vmatpush1.bf16.msra.mxu0 %v460
    %631 = vmatprep.subr.bf16.mxu0 %v463
    %632 = vmatpush1.bf16.msra.mxu0 %v462
    %633 = vmatprep.subr.bf16.mxu0 %v465
    %634 = vmatpush1.bf16.msra.mxu0 %v464
    %635 = vmatprep.subr.bf16.mxu0 %v467
    %636 = vmatpush1.bf16.msra.mxu0 %v466
    %637 = vmatprep.subr.bf16.mxu0 %v469
    %638 = vmatpush1.bf16.msra.mxu0 %v468
    %639 = vmatprep.subr.bf16.mxu0 %v471
    %640 = vmatpush1.bf16.msra.mxu0 %v470
    %641 = vmatprep.mubr.bf16.mxu0 %v161
    %642 = vmatmul.mubr.bf16.gmra.mrb[0].mxu0 %v160
    %v643 = vpop.f32.mrb[0].mxu0
    %v644 = vadd.f32 %v603, %v643
    %v645 = vpop.f32.mrb[0].mxu0
    %v646 = vadd.f32 %v605, %v645
    %v647 = vpop.f32.mrb[0].mxu0
    %v648 = vpop.f32.mrb[0].mxu0
    %649 = vdwg.mxu0
    %650 = vmatprep.subr.bf16.mxu0 %v473
    %651 = vmatpush1.bf16.msra.mxu0 %v472
    %652 = vmatprep.subr.bf16.mxu0 %v475
    %653 = vmatpush1.bf16.msra.mxu0 %v474
    %654 = vmatprep.subr.bf16.mxu0 %v477
    %655 = vmatpush1.bf16.msra.mxu0 %v476
    %656 = vmatprep.subr.bf16.mxu0 %v479
    %657 = vmatpush1.bf16.msra.mxu0 %v478
    %658 = vmatprep.subr.bf16.mxu0 %v481
    %659 = vmatpush1.bf16.msra.mxu0 %v480
    %660 = vmatprep.subr.bf16.mxu0 %v483
    %661 = vmatpush1.bf16.msra.mxu0 %v482
    %662 = vmatprep.subr.bf16.mxu0 %v485
    %663 = vmatpush1.bf16.msra.mxu0 %v484
    %664 = vmatprep.subr.bf16.mxu0 %v487
    %665 = vmatpush1.bf16.msra.mxu0 %v486
    %666 = vmatprep.subr.bf16.mxu0 0
    %667 = vmatpush1.bf16.msra.mxu0 0
    %668 = vmatprep.subr.bf16.mxu0 0
    %669 = vmatpush1.bf16.msra.mxu0 0
    %670 = vmatprep.subr.bf16.mxu0 0
    %671 = vmatpush1.bf16.msra.mxu0 0
    %672 = vmatprep.subr.bf16.mxu0 0
    %673 = vmatpush1.bf16.msra.mxu0 0
    %674 = vmatprep.subr.bf16.mxu0 0
    %675 = vmatpush1.bf16.msra.mxu0 0
    %676 = vmatprep.subr.bf16.mxu0 0
    %677 = vmatpush1.bf16.msra.mxu0 0
    %678 = vmatprep.subr.bf16.mxu0 0
    %679 = vmatpush1.bf16.msra.mxu0 0
    %680 = vmatprep.subr.bf16.mxu0 0
    %681 = vmatpush1.bf16.msra.mxu0 0
    %682 = vmatprep.mubr.bf16.mxu0 0
    %683 = vmatmul.mubr.bf16.gmra.mrb[0].mxu0 %v162
    %v684 = vpop.f32.mrb[0].mxu0
    %v685 = vadd.f32 %v644, %v684
    %v686 = vpop.f32.mrb[0].mxu0
    %v687 = vadd.f32 %v646, %v686
    %v688 = vpop.f32.mrb[0].mxu0
    %v689 = vpop.f32.mrb[0].mxu0
    %690 = vdwg.mxu0
    %v691 = vmax.f32 %v685, 0.0
    %v692 = vmax.f32 %v687, 0.0
    %v693 = vpack.c.bf16 %v691, %v691
    %v694 = vpack.c.bf16 %v692, %v692
    %v695 = vld [vmem:[#allocation4] sm:$0xf]
    %v696 = vld [vmem:[#allocation4 + $0x4] sm:$0xf]
    %v697 = vld [vmem:[#allocation4 + $0x8] sm:$0xf]
    %v698 = vld [vmem:[#allocation4 + $0xc] sm:$0xf]
    %v699 = vld [vmem:[#allocation4 + $0x10] sm:$0xf]
    %v700 = vld [vmem:[#allocation4 + $0x14] sm:$0xf]
    %v701 = vld [vmem:[#allocation4 + $0x18] sm:$0xf]
    %v702 = vld [vmem:[#allocation4 + $0x1c] sm:$0xf]
    %v703 = vld [vmem:[#allocation4 + $0x20] sm:$0xf]
    %v704 = vld [vmem:[#allocation4 + $0x24] sm:$0xf]
    %v705 = vld [vmem:[#allocation4 + $0x28] sm:$0xf]
    %v706 = vld [vmem:[#allocation4 + $0x2c] sm:$0xf]
    %v707 = vld [vmem:[#allocation4 + $0x30] sm:$0xf]
    %v708 = vld [vmem:[#allocation4 + $0x34] sm:$0xf]
    %v709 = vld [vmem:[#allocation4 + $0x38] sm:$0xf]
    %v710 = vld [vmem:[#allocation4 + $0x3c] sm:$0xf]
    %v711 = vld [vmem:[#allocation4 + $0x40] sm:$0xf]
    %v712 = vld [vmem:[#allocation4 + $0x44] sm:$0xf]
    %v713 = vld [vmem:[#allocation4 + $0x48] sm:$0xf]
    %v714 = vld [vmem:[#allocation4 + $0x4c] sm:$0xf]
    %v715 = vld [vmem:[#allocation4 + $0x50] sm:$0xf]
    %v716 = vld [vmem:[#allocation4 + $0x54] sm:$0xf]
    %v717 = vld [vmem:[#allocation4 + $0x58] sm:$0xf]
    %v718 = vld [vmem:[#allocation4 + $0x5c] sm:$0xf]
    %v719 = vld [vmem:[#allocation4 + $0x60] sm:$0xf]
    %v720 = vld [vmem:[#allocation4 + $0x64] sm:$0xf]
    %v721 = vld [vmem:[#allocation4 + $0x68] sm:$0xf]
    %v722 = vld [vmem:[#allocation4 + $0x6c] sm:$0xf]
    %v723 = vld [vmem:[#allocation4 + $0x70] sm:$0xf]
    %v724 = vld [vmem:[#allocation4 + $0x74] sm:$0xf]
    %v725 = vld [vmem:[#allocation4 + $0x78] sm:$0xf]
    %v726 = vld [vmem:[#allocation4 + $0x7c] sm:$0xf]
    %v727 = vld [vmem:[%s4] sm:$0x1]
    %v729 = vlaneseq
    %v730 = vshrl.u32 %v729, 7
    %v731 = vsub.s32 0, %v730
    %v732 = vrot.slane %v727, %v731
    %v766 = vunpack.c.l.b16 %v695
    %v767 = vunpack.c.l.b16 %v696
    %v768 = vunpack.c.l.b16 %v697
    %v769 = vunpack.c.l.b16 %v698
    %v770 = vunpack.c.l.b16 %v699
    %v771 = vunpack.c.l.b16 %v700
    %v772 = vunpack.c.l.b16 %v701
    %v773 = vunpack.c.l.b16 %v702
    %v774 = vunpack.c.l.b16 %v703
    %v775 = vunpack.c.l.b16 %v704
    %v776 = vunpack.c.l.b16 %v705
    %v777 = vunpack.c.l.b16 %v706
    %v778 = vunpack.c.l.b16 %v707
    %v779 = vunpack.c.l.b16 %v708
    %v780 = vunpack.c.l.b16 %v709
    %v781 = vunpack.c.l.b16 %v710
    %v782 = vunpack.c.l.b16 %v711
    %v783 = vunpack.c.l.b16 %v712
    %v784 = vunpack.c.l.b16 %v713
    %v785 = vunpack.c.l.b16 %v714
    %v786 = vunpack.c.l.b16 %v715
    %v787 = vunpack.c.l.b16 %v716
    %v788 = vunpack.c.l.b16 %v717
    %v789 = vunpack.c.l.b16 %v718
    %v790 = vunpack.c.l.b16 %v719
    %v791 = vunpack.c.l.b16 %v720
    %v792 = vunpack.c.l.b16 %v721
    %v793 = vunpack.c.l.b16 %v722
    %v794 = vunpack.c.l.b16 %v723
    %v795 = vunpack.c.l.b16 %v724
    %v796 = vunpack.c.l.b16 %v725
    %v797 = vunpack.c.l.b16 %v726
    %v798 = vpack.c.b16 %v767, %v766
    %v799 = vpack.c.b16 %v769, %v768
    %v800 = vpack.c.b16 %v771, %v770
    %v801 = vpack.c.b16 %v773, %v772
    %v802 = vpack.c.b16 %v775, %v774
    %v803 = vpack.c.b16 %v777, %v776
    %v804 = vpack.c.b16 %v779, %v778
    %v805 = vpack.c.b16 %v781, %v780
    %v806 = vpack.c.b16 %v783, %v782
    %v807 = vpack.c.b16 %v785, %v784
    %v808 = vpack.c.b16 %v787, %v786
    %v809 = vpack.c.b16 %v789, %v788
    %v810 = vpack.c.b16 %v791, %v790
    %v811 = vpack.c.b16 %v793, %v792
    %v812 = vpack.c.b16 %v795, %v794
    %v813 = vpack.c.b16 %v797, %v796
    %830 = vmatprep.subr.bf16.mxu0 0
    %831 = vmatpush1.bf16.msra.mxu0 %v798
    %832 = vmatprep.subr.bf16.mxu0 0
    %833 = vmatpush1.bf16.msra.mxu0 %v799
    %834 = vmatprep.subr.bf16.mxu0 0
    %835 = vmatpush1.bf16.msra.mxu0 %v800
    %836 = vmatprep.subr.bf16.mxu0 0
    %837 = vmatpush1.bf16.msra.mxu0 %v801
    %838 = vmatprep.subr.bf16.mxu0 0
    %839 = vmatpush1.bf16.msra.mxu0 %v802
    %840 = vmatprep.subr.bf16.mxu0 0
    %841 = vmatpush1.bf16.msra.mxu0 %v803
    %842 = vmatprep.subr.bf16.mxu0 0
    %843 = vmatpush1.bf16.msra.mxu0 %v804
    %844 = vmatprep.subr.bf16.mxu0 0
    %845 = vmatpush1.bf16.msra.mxu0 %v805
    %846 = vmatprep.subr.bf16.mxu0 0
    %847 = vmatpush1.bf16.msra.mxu0 %v806
    %848 = vmatprep.subr.bf16.mxu0 0
    %849 = vmatpush1.bf16.msra.mxu0 %v807
    %850 = vmatprep.subr.bf16.mxu0 0
    %851 = vmatpush1.bf16.msra.mxu0 %v808
    %852 = vmatprep.subr.bf16.mxu0 0
    %853 = vmatpush1.bf16.msra.mxu0 %v809
    %854 = vmatprep.subr.bf16.mxu0 0
    %855 = vmatpush1.bf16.msra.mxu0 %v810
    %856 = vmatprep.subr.bf16.mxu0 0
    %857 = vmatpush1.bf16.msra.mxu0 %v811
    %858 = vmatprep.subr.bf16.mxu0 0
    %859 = vmatpush1.bf16.msra.mxu0 %v812
    %860 = vmatprep.subr.bf16.mxu0 0
    %861 = vmatpush1.bf16.msra.mxu0 %v813
    %862 = vmatprep.mubr.bf16.mxu0 %v694
    %863 = vmatmul.mubr.bf16.gmra.mrb[0].mxu0 %v693
    %v864 = vpop.f32.mrb[0].mxu0
    %v865 = vadd.f32 %v732, %v864
    %v866 = vpop.f32.mrb[0].mxu0
    %v867 = vpop.f32.mrb[0].mxu0
    %v868 = vpop.f32.mrb[0].mxu0
    %869 = vdwg.mxu0
    %v870 = vmax.f32 %v865, 0.0
    %v871 = vpack.c.bf16 %v870, %v870
    %v872 = vld [vmem:[%s5] sm:$0xf]
    %v873 = vld [vmem:[%s5 + $0x4] sm:$0xf]
    %v874 = vld [vmem:[%s5 + $0x8] sm:$0xf]
    %v875 = vld [vmem:[%s5 + $0xc] sm:$0xf]
    %v876 = vld [vmem:[%s5 + $0x10] sm:$0xf]
    %v877 = vld [vmem:[%s5 + $0x14] sm:$0xf]
    %v878 = vld [vmem:[%s5 + $0x18] sm:$0xf]
    %v879 = vld [vmem:[%s5 + $0x1c] sm:$0xf]
    %v880 = vld [vmem:[%s5 + $0x20] sm:$0xf]
    %v881 = vld [vmem:[%s5 + $0x24] sm:$0xf]
    %v882 = vld [vmem:[%s5 + $0x28] sm:$0xf]
    %v883 = vld [vmem:[%s5 + $0x2c] sm:$0xf]
    %v884 = vld [vmem:[%s5 + $0x30] sm:$0xf]
    %v885 = vld [vmem:[%s5 + $0x34] sm:$0xf]
    %v886 = vld [vmem:[%s5 + $0x38] sm:$0xf]
    %v887 = vld [vmem:[%s5 + $0x3c] sm:$0xf]
    %v888 = vld [vmem:[%s6] sm:$0x1]
    %v890 = vlaneseq
    %v891 = vshrl.u32 %v890, 7
    %v892 = vsub.s32 0, %v891
    %v893 = vrot.slane %v888, %v892
    %v911 = vunpack.c.l.b16 %v872
    %v912 = vunpack.c.l.b16 %v873
    %v913 = vunpack.c.l.b16 %v874
    %v914 = vunpack.c.l.b16 %v875
    %v915 = vunpack.c.l.b16 %v876
    %v916 = vunpack.c.l.b16 %v877
    %v917 = vunpack.c.l.b16 %v878
    %v918 = vunpack.c.l.b16 %v879
    %v919 = vunpack.c.l.b16 %v880
    %v920 = vunpack.c.l.b16 %v881
    %v921 = vunpack.c.l.b16 %v882
    %v922 = vunpack.c.l.b16 %v883
    %v923 = vunpack.c.l.b16 %v884
    %v924 = vunpack.c.l.b16 %v885
    %v925 = vunpack.c.l.b16 %v886
    %v926 = vunpack.c.l.b16 %v887
    %v927 = vpack.c.b16 %v912, %v911
    %v928 = vpack.c.b16 %v914, %v913
    %v929 = vpack.c.b16 %v916, %v915
    %v930 = vpack.c.b16 %v918, %v917
    %v931 = vpack.c.b16 %v920, %v919
    %v932 = vpack.c.b16 %v922, %v921
    %v933 = vpack.c.b16 %v924, %v923
    %v934 = vpack.c.b16 %v926, %v925
    %943 = vmatprep.subr.bf16.mxu0 0
    %944 = vmatpush1.bf16.msra.mxu0 %v927
    %945 = vmatprep.subr.bf16.mxu0 0
    %946 = vmatpush1.bf16.msra.mxu0 %v928
    %947 = vmatprep.subr.bf16.mxu0 0
    %948 = vmatpush1.bf16.msra.mxu0 %v929
    %949 = vmatprep.subr.bf16.mxu0 0
    %950 = vmatpush1.bf16.msra.mxu0 %v930
    %951 = vmatprep.subr.bf16.mxu0 0
    %952 = vmatpush1.bf16.msra.mxu0 %v931
    %953 = vmatprep.subr.bf16.mxu0 0
    %954 = vmatpush1.bf16.msra.mxu0 %v932
    %955 = vmatprep.subr.bf16.mxu0 0
    %956 = vmatpush1.bf16.msra.mxu0 %v933
    %957 = vmatprep.subr.bf16.mxu0 0
    %958 = vmatpush1.bf16.msra.mxu0 %v934
    %959 = vmatprep.subr.bf16.mxu0 0
    %960 = vmatpush1.bf16.msra.mxu0 0
    %961 = vmatprep.subr.bf16.mxu0 0
    %962 = vmatpush1.bf16.msra.mxu0 0
    %963 = vmatprep.subr.bf16.mxu0 0
    %964 = vmatpush1.bf16.msra.mxu0 0
    %965 = vmatprep.subr.bf16.mxu0 0
    %966 = vmatpush1.bf16.msra.mxu0 0
    %967 = vmatprep.subr.bf16.mxu0 0
    %968 = vmatpush1.bf16.msra.mxu0 0
    %969 = vmatprep.subr.bf16.mxu0 0
    %970 = vmatpush1.bf16.msra.mxu0 0
    %971 = vmatprep.subr.bf16.mxu0 0
    %972 = vmatpush1.bf16.msra.mxu0 0
    %973 = vmatprep.subr.bf16.mxu0 0
    %974 = vmatpush1.bf16.msra.mxu0 0
    %975 = vmatprep.mubr.bf16.mxu0 0
    %976 = vmatmul.mubr.bf16.gmra.mrb[0].mxu0 %v871
    %v977 = vpop.f32.mrb[0].mxu0
    %v978 = vadd.f32 %v893, %v977
    %v979 = vpop.f32.mrb[0].mxu0
    %v980 = vpop.f32.mrb[0].mxu0
    %v981 = vpop.f32.mrb[0].mxu0
    %982 = vdwg.mxu0
    %v983 = vmax.f32 %v978, 0.0
    %vm984 = vcmask 15360
    %985 = vst.msk [vmem:[%s7] sm:$0xff] %vm984, %v983
    // Predicated region
    $region38: #{tpu_custom_call.1} parent=1 // pred_check
      _
    $region39: #{tpu_custom_call.1} parent=1 // pred_check_branch
      %987 = sbr.rel (0) target = $region41
    $region40: #{tpu_custom_call.1} parent=1 // pred_region
      _
    $region41: #{tpu_custom_call.1} parent=1 // pred_fallthru
      _
    // Predicated region
    $region42: #{tpu_custom_call.1} parent=1 // pred_check
      _
    $region43: #{tpu_custom_call.1} parent=1 // pred_check_branch
      %989 = sbr.rel (0) target = $region45
    $region44: #{tpu_custom_call.1} parent=1 // pred_region
      _
    $region45: #{tpu_custom_call.1} parent=1 // pred_fallthru
      _
    %990 = vsyncpa [#allocation3], 1
    %991 = vsyncpa [#allocation5], 1

</llo_original>
